<compile_context>
chip_gen: v7x
topology: tpu7x:2x2x1
jax: 0.10.0
libtpu: 0.0.40
codegen_flags: <defaults>
</compile_context>

<pallas_src>
import math

import jax
import jax.numpy as jnp
from jax.experimental import pallas as pl
from jax.experimental.pallas import tpu as pltpu


def _round_up(x, m):
    return ((x + m - 1) // m) * m


def _vmem_capacity_bytes():
    """Per-TensorCore VMEM capacity, with a conservative fallback."""
    try:
        info = pltpu.get_tpu_info()
        cap = int(getattr(info, "vmem_capacity_bytes", 0))
        if cap > 0:
            return cap
    except Exception:
        pass
    return 64 << 20          # smallest per-core VMEM across v5e/v6e/v7x


def _row_tile_target(vmem_cap):
    """Target row-tile size per chip generation."""
    kind = ""
    try:
        kind = jax.devices()[0].device_kind.lower()
    except Exception:
        pass
    if "v5e" in kind or "v5 lite" in kind or "v5lite" in kind:
        return 256           # v5e ridge ~240 FLOP/B: tm=256 already compute-bound
    if vmem_cap <= (64 << 20):
        return 512           # v7x-class: 64 MiB VMEM per TensorCore
    return 1024              # v6e-class: 128 MiB VMEM


def _pick_row_tile(M, tm_target):
    """Split M evenly into ceil(M / target) tiles (each a multiple of 8 rows)."""
    n_tiles = max(1, math.ceil(M / tm_target))
    return _round_up(math.ceil(M / n_tiles), 8)


def _hidden_tile_candidates(H, cap=2048):
    cands = [t for t in range(128, min(H, cap) + 1, 128) if H % t == 0]
    if not cands:
        # Awkward H with no multiple-of-128 divisor: fall back to a full-H
        # slab (still correct; very large H may then need the full VMEM cap).
        cands = [H]
    return cands


def _vmem_estimate(tm, th, C, itm, wtm, otm, use_acc):
    """Rough VMEM footprint of one grid step (double-buffered pipeline)."""
    x_bytes = 2 * tm * C * itm                  # x row tile
    w_bytes = 2 * (C * th + th * C) * wtm       # W1 / W2 slabs
    b_bytes = 2 * (th + C) * wtm                # b1 / b2 slices
    o_bytes = 2 * tm * C * otm                  # output tile
    a_bytes = tm * C * 4 if use_acc else 0      # f32 accumulator scratch
    # first-matmul intermediate: f32 h plus the cast copy fed to the 2nd matmul
    i_bytes = tm * th * (4 + (wtm if wtm != 4 else 0))
    return x_bytes + w_bytes + b_bytes + o_bytes + a_bytes + i_bytes


def _select_tiles(M, C, H, itm, wtm, otm, use_acc, vmem_budget, tm_target):
    cands = _hidden_tile_candidates(H)
    tm = _pick_row_tile(M, tm_target)
    while True:
        fitting = [t for t in cands
                   if _vmem_estimate(tm, t, C, itm, wtm, otm, use_acc)
                   <= vmem_budget]
        if fitting:
            return tm, max(fitting)
        if tm <= 128:
            # Nothing fits even with a small row tile: take the smallest slab
            # and let vmem_limit_bytes stretch toward the physical cap.
            return tm, min(cands)
        tm = max(128, _round_up(tm // 2, 8))


def _ffn_kernel_f32(x_ref, w1_ref, b1_ref, w2_ref, b2_ref, o_ref):
    """f32-output path: accumulate directly into the resident output tile."""
    h_idx = pl.program_id(1)
    h = jnp.dot(x_ref[...], w1_ref[...], preferred_element_type=jnp.float32)
    h = jnp.maximum(h + b1_ref[...], 0.0)
    partial = jnp.dot(h.astype(w2_ref.dtype), w2_ref[...],
                      preferred_element_type=jnp.float32)

    @pl.when(h_idx == 0)
    def _init():
        o_ref[...] = partial + b2_ref[...]

    @pl.when(h_idx != 0)
    def _accum():
        o_ref[...] += partial


def _ffn_kernel_acc(x_ref, w1_ref, b1_ref, w2_ref, b2_ref, o_ref, acc_ref):
    """Generic path (e.g. bf16 output): f32 scratch accumulator + finalize."""
    h_idx = pl.program_id(1)

    @pl.when(h_idx == 0)
    def _init():
        acc_ref[...] = jnp.zeros_like(acc_ref)

    h = jnp.dot(x_ref[...], w1_ref[...], preferred_element_type=jnp.float32)
    h = jnp.maximum(h + b1_ref[...], 0.0)
    acc_ref[...] += jnp.dot(h.astype(w2_ref.dtype), w2_ref[...],
                            preferred_element_type=jnp.float32)

    @pl.when(h_idx == pl.num_programs(1) - 1)
    def _finalize():
        o_ref[...] = (acc_ref[...] + b2_ref[...]).astype(o_ref.dtype)


def feed_forward(x, w1, b1, w2, b2, *, tm=None, th=None):
    """x: (B, T, C); w1: (C, H); b1: (H,); w2: (H, C); b2: (C,), H = 4*C."""
    B, T, C = x.shape
    H = w1.shape[1]
    M = B * T
    out_dtype = x.dtype
    use_acc = out_dtype != jnp.float32

    itm = jnp.dtype(x.dtype).itemsize
    wtm = jnp.dtype(w1.dtype).itemsize
    otm = jnp.dtype(out_dtype).itemsize

    # ---- tile selection (chip-aware) ------------------------------------
    vmem_cap = _vmem_capacity_bytes()
    vmem_budget = int(0.80 * vmem_cap)
    auto_tm, auto_th = _select_tiles(M, C, H, itm, wtm, otm, use_acc,
                                     vmem_budget, _row_tile_target(vmem_cap))
    if tm is None:
        tm = auto_tm
    if th is None:
        th = auto_th
    tm = _round_up(max(8, tm), 8)
    assert H % th == 0, "hidden tile must divide the hidden dimension"

    M_pad = _round_up(M, tm)
    x2 = x.reshape(M, C)
    if M_pad != M:
        x2 = jnp.pad(x2, ((0, M_pad - M), (0, 0)))    # tail rows are discarded
    b1_2 = b1.reshape(1, H)
    b2_2 = b2.reshape(1, C)

    grid = (M_pad // tm, H // th)
    num_row_tiles = grid[0]

    # Advisory cost estimate: weights/biases are re-streamed once per row
    # tile; x read once; output written once in its own dtype.
    def _nbytes(a):
        return int(a.size) * jnp.dtype(a.dtype).itemsize
    weight_stream = _nbytes(w1) + _nbytes(w2) + _nbytes(b1) + _nbytes(b2)
    cost = pl.CostEstimate(
        flops=4 * M_pad * C * H,
        transcendentals=0,
        bytes_accessed=int(_nbytes(x2) + M_pad * C * otm
                           + weight_stream * num_row_tiles),
    )

    est = _vmem_estimate(tm, th, C, itm, wtm, otm, use_acc)
    vmem_limit = int(min(max(est + (8 << 20), 32 << 20), int(0.90 * vmem_cap)))

    if use_acc:
        kernel = _ffn_kernel_acc
        scratch_shapes = [pltpu.VMEM((tm, C), jnp.float32)]
    else:
        kernel = _ffn_kernel_f32
        scratch_shapes = []

    out = pl.pallas_call(
        kernel,
        out_shape=jax.ShapeDtypeStruct((M_pad, C), out_dtype),
        grid_spec=pltpu.PrefetchScalarGridSpec(
            num_scalar_prefetch=0,
            grid=grid,
            in_specs=[
                pl.BlockSpec((tm, C), lambda i, h: (i, 0)),   # x row tile
                pl.BlockSpec((C, th), lambda i, h: (0, h)),   # W1 slab
                pl.BlockSpec((1, th), lambda i, h: (0, h)),   # b1 slice
                pl.BlockSpec((th, C), lambda i, h: (h, 0)),   # W2 slab
                pl.BlockSpec((1, C), lambda i, h: (0, 0)),    # b2
            ],
            out_specs=pl.BlockSpec((tm, C), lambda i, h: (i, 0)),
            scratch_shapes=scratch_shapes,
        ),
        compiler_params=pltpu.CompilerParams(
            dimension_semantics=("parallel", "arbitrary"),
            vmem_limit_bytes=vmem_limit,
        ),
        cost_estimate=cost,
    )(x2, w1, b1_2, w2, b2_2)

    if M_pad != M:
        out = out[:M]
    return out.reshape(B, T, C)


def _reference(x, w1, b1, w2, b2):
    h = jnp.maximum(x @ w1 + b1, 0.0)
    return h @ w2 + b2


if __name__ == "__main__":
    B, T, n_embd = 2, 8, 32
    hidden = 4 * n_embd  # 128

    key = jax.random.PRNGKey(0)
    kx, kw1, kb1, kw2, kb2 = jax.random.split(key, 5)

    x = jax.random.normal(kx, (B, T, n_embd), dtype=jnp.float32)
    # PyTorch Linear-style init, weights stored transposed as (in, out).
    bound1 = 1.0 / (n_embd ** 0.5)
    bound2 = 1.0 / (hidden ** 0.5)
    w1 = jax.random.uniform(kw1, (n_embd, hidden), minval=-bound1, maxval=bound1,
                            dtype=jnp.float32)
    b1 = jax.random.uniform(kb1, (hidden,), minval=-bound1, maxval=bound1,
                            dtype=jnp.float32)
    w2 = jax.random.uniform(kw2, (hidden, n_embd), minval=-bound2, maxval=bound2,
                            dtype=jnp.float32)
    b2 = jax.random.uniform(kb2, (n_embd,), minval=-bound2, maxval=bound2,
                            dtype=jnp.float32)

    # f32 path (direct accumulation into the output tile), tight tolerance.
    y = jax.block_until_ready(jax.jit(feed_forward)(x, w1, b1, w2, b2))
    y_ref = _reference(x, w1, b1, w2, b2)
    assert y.shape == (B, T, n_embd)
    assert jnp.allclose(y, y_ref, atol=1e-5, rtol=1e-5), "f32 mismatch vs reference"

    # bf16 fast path + ragged token count (exercises padding / accumulator path).
    xb = jax.random.normal(kx, (3, 7, n_embd), dtype=jnp.bfloat16)
    w1b, b1b = w1.astype(jnp.bfloat16), b1.astype(jnp.bfloat16)
    w2b, b2b = w2.astype(jnp.bfloat16), b2.astype(jnp.bfloat16)
    yb = jax.block_until_ready(jax.jit(feed_forward)(xb, w1b, b1b, w2b, b2b))
    yb_ref = _reference(xb.astype(jnp.float32), w1b.astype(jnp.float32),
                        b1b.astype(jnp.float32), w2b.astype(jnp.float32),
                        b2b.astype(jnp.float32))
    assert yb.shape == (3, 7, n_embd)
    assert jnp.allclose(yb.astype(jnp.float32), yb_ref, atol=5e-2, rtol=5e-2), \
        "bf16 mismatch vs reference"

    print("KERNEL_OK")
</pallas_src>

<mosaic_0001>
module attributes {stable_mosaic.version = 11 : i64} {
  func.func @_ffn_kernel_f32(%arg0: i32, %arg1: i32, %arg2: memref<16x32xf32, #tpu.memory_space<vmem>>, %arg3: memref<32x128xf32, #tpu.memory_space<vmem>>, %arg4: memref<1x128xf32, #tpu.memory_space<vmem>>, %arg5: memref<128x32xf32, #tpu.memory_space<vmem>>, %arg6: memref<1x32xf32, #tpu.memory_space<vmem>>, %arg7: memref<16x32xf32, #tpu.memory_space<vmem>>) attributes {dimension_semantics = [#tpu.dimension_semantics<parallel>, #tpu.dimension_semantics<arbitrary>], iteration_bounds = array<i64: 1, 1>, scalar_prefetch = 0 : i64, scratch_operands = 0 : i64, tpu.core_type = #tpu.core_type<tc>, window_params = [{transform_indices = @transform_0, window_bounds = array<i64: 16, 32>}, {transform_indices = @transform_1, window_bounds = array<i64: 32, 128>}, {transform_indices = @transform_2, window_bounds = array<i64: 1, 128>}, {transform_indices = @transform_3, window_bounds = array<i64: 128, 32>}, {pipeline_mode = #tpu.pipeline_mode<synchronous>, transform_indices = @transform_4, window_bounds = array<i64: 1, 32>}, {transform_indices = @transform_5, window_bounds = array<i64: 16, 32>}]} {
    %c0 = arith.constant 0 : index
    %c0_0 = arith.constant 0 : index
    %0 = vector.load %arg2[%c0, %c0_0] : memref<16x32xf32, #tpu.memory_space<vmem>>, vector<16x32xf32>
    %c0_1 = arith.constant 0 : index
    %c0_2 = arith.constant 0 : index
    %1 = vector.load %arg3[%c0_1, %c0_2] : memref<32x128xf32, #tpu.memory_space<vmem>>, vector<32x128xf32>
    %cst = arith.constant dense<0.000000e+00> : vector<16x128xf32>
    %2 = tpu.matmul %0, %1, %cst {dimension_numbers = #tpu.dot_dimension_numbers<[1], [0], [0], [1], [0, 0, 1, 1], [], []>} : vector<16x32xf32>, vector<32x128xf32>, vector<16x128xf32> -> vector<16x128xf32>
    %c0_3 = arith.constant 0 : index
    %c0_4 = arith.constant 0 : index
    %3 = vector.load %arg4[%c0_3, %c0_4] : memref<1x128xf32, #tpu.memory_space<vmem>>, vector<1x128xf32>
    %4 = vector.broadcast %3 : vector<1x128xf32> to vector<16x128xf32>
    %5 = arith.addf %2, %4 : vector<16x128xf32>
    %cst_5 = arith.constant 0.000000e+00 : f32
    %6 = vector.broadcast %cst_5 : f32 to vector<16x128xf32>
    %7 = arith.maximumf %5, %6 : vector<16x128xf32>
    %c0_6 = arith.constant 0 : index
    %c0_7 = arith.constant 0 : index
    %8 = vector.load %arg5[%c0_6, %c0_7] : memref<128x32xf32, #tpu.memory_space<vmem>>, vector<128x32xf32>
    %cst_8 = arith.constant dense<0.000000e+00> : vector<16x32xf32>
    %9 = tpu.matmul %7, %8, %cst_8 {dimension_numbers = #tpu.dot_dimension_numbers<[1], [0], [0], [1], [0, 0, 1, 1], [], []>} : vector<16x128xf32>, vector<128x32xf32>, vector<16x32xf32> -> vector<16x32xf32>
    %c0_i32 = arith.constant 0 : i32
    %10 = arith.cmpi eq, %arg1, %c0_i32 : i32
    %11 = arith.extui %10 : i1 to i32
    %c0_i32_9 = arith.constant 0 : i32
    %12 = arith.cmpi ne, %11, %c0_i32_9 : i32
    scf.if %12 {
      %c0_12 = arith.constant 0 : index
      %c0_13 = arith.constant 0 : index
      %16 = vector.load %arg6[%c0_12, %c0_13] : memref<1x32xf32, #tpu.memory_space<vmem>>, vector<1x32xf32>
      %17 = vector.broadcast %16 : vector<1x32xf32> to vector<16x32xf32>
      %18 = arith.addf %9, %17 : vector<16x32xf32>
      %c0_14 = arith.constant 0 : index
      %c0_15 = arith.constant 0 : index
      %19 = vector.load %arg7[%c0_14, %c0_15] : memref<16x32xf32, #tpu.memory_space<vmem>>, vector<16x32xf32>
      tpu.vector_store %arg7[%c0_14, %c0_15], %18 {strides = array<i32>} : memref<16x32xf32, #tpu.memory_space<vmem>>, vector<16x32xf32>,
    } else {
    }
    %c0_i32_10 = arith.constant 0 : i32
    %13 = arith.cmpi ne, %arg1, %c0_i32_10 : i32
    %14 = arith.extui %13 : i1 to i32
    %c0_i32_11 = arith.constant 0 : i32
    %15 = arith.cmpi ne, %14, %c0_i32_11 : i32
    scf.if %15 {
      %c0_12 = arith.constant 0 : index
      %c0_13 = arith.constant 0 : index
      %16 = vector.load %arg7[%c0_12, %c0_13] : memref<16x32xf32, #tpu.memory_space<vmem>>, vector<16x32xf32>
      %17 = arith.addf %16, %9 : vector<16x32xf32>
      %c0_14 = arith.constant 0 : index
      %c0_15 = arith.constant 0 : index
      %18 = vector.load %arg7[%c0_14, %c0_15] : memref<16x32xf32, #tpu.memory_space<vmem>>, vector<16x32xf32>
      tpu.vector_store %arg7[%c0_14, %c0_15], %17 {strides = array<i32>} : memref<16x32xf32, #tpu.memory_space<vmem>>, vector<16x32xf32>,
    } else {
    }
    return
  }
  func.func @transform_0(%arg0: i32, %arg1: i32) -> (i32, i32) {
    %c0_i32 = arith.constant 0 : i32
    %c0_i32_0 = arith.constant 0 : i32
    return %arg0, %c0_i32 : i32, i32
  }
  func.func @transform_1(%arg0: i32, %arg1: i32) -> (i32, i32) {
    %c0_i32 = arith.constant 0 : i32
    %c0_i32_0 = arith.constant 0 : i32
    return %c0_i32, %arg1 : i32, i32
  }
  func.func @transform_2(%arg0: i32, %arg1: i32) -> (i32, i32) {
    %c0_i32 = arith.constant 0 : i32
    %c0_i32_0 = arith.constant 0 : i32
    return %c0_i32, %arg1 : i32, i32
  }
  func.func @transform_3(%arg0: i32, %arg1: i32) -> (i32, i32) {
    %c0_i32 = arith.constant 0 : i32
    %c0_i32_0 = arith.constant 0 : i32
    return %arg1, %c0_i32 : i32, i32
  }
  func.func @transform_4(%arg0: i32, %arg1: i32) -> (i32, i32) {
    %c0_i32 = arith.constant 0 : i32
    %c0_i32_0 = arith.constant 0 : i32
    %c0_i32_1 = arith.constant 0 : i32
    return %c0_i32, %c0_i32_0 : i32, i32
  }
  func.func @transform_5(%arg0: i32, %arg1: i32) -> (i32, i32) {
    %c0_i32 = arith.constant 0 : i32
    %c0_i32_0 = arith.constant 0 : i32
    return %arg0, %c0_i32 : i32, i32
  }
}

</mosaic_0001>

<llo_original>
// kernel: feed_forward.1
$region0: #{feed_forward.1}
  #allocation0 [shape = 'u32[]', space=smem, size = 0x4, offset = 0x4, fixed_abs, tag = 'smem constant byte address 0x4 - core index']
  #allocation1 [shape = 'u32[144,128]{1,0:T(1,128)}', space=vmem, size = 0x12000, scoped, tag = 'internal scratch']
  %s0 = inlined_call_operand.vmem [shape: f32[16,32], index: 0, kind: input, shape index: {}]
  %s1 = inlined_call_operand.vmem [shape: f32[32,128], index: 1, kind: input, shape index: {}]
  %s2 = inlined_call_operand.vmem [shape: f32[1,128], index: 2, kind: input, shape index: {}]
  %s3 = inlined_call_operand.vmem [shape: f32[128,32], index: 3, kind: input, shape index: {}]
  %s4 = inlined_call_operand.vmem [shape: f32[1,32], index: 4, kind: input, shape index: {}]
  %s5 = inlined_call_operand.hbm [shape: f32[16,32], index: 5, kind: output, shape index: {}]
  %s6 = sld [smem:[#allocation0]]
  $region38: #{feed_forward.1} parent=0
    _
  %s8 = ssub.s32 1, %s6
  %s9 = scalar_select 0, %s8, %s6
  $region1: #{feed_forward.1} parent=0
    #allocation2 [shape = 'u8[8192]{0}', space=vmem, size = 0x2000, scoped, tag = 'output window, operand 0, single buffered']
    #allocation3 [shape = 's32[1]{0}', space=sflag, size = 0x4, scoped, tag = 'scoped memory for feed_forward.1']
    %10 = vsyncpa [#allocation3], 0
    // Predicated region
    $region2: #{feed_forward.1} parent=1 // pred_check
      _
    $region3: #{feed_forward.1} parent=1 // pred_check_branch
      %12 = sbr.rel (0) target = $region5
    $region4: #{feed_forward.1} parent=1 // pred_region
      _
    $region5: #{feed_forward.1} parent=1 // pred_fallthru
      _
    // Predicated region
    $region6: #{feed_forward.1} parent=1 // pred_check
      _
    $region7: #{feed_forward.1} parent=1 // pred_check_branch
      %14 = sbr.rel (0) target = $region9
    $region8: #{feed_forward.1} parent=1 // pred_region
      _
    $region9: #{feed_forward.1} parent=1 // pred_fallthru
      _
    // Predicated region
    $region10: #{feed_forward.1} parent=1 // pred_check
      _
    $region11: #{feed_forward.1} parent=1 // pred_check_branch
      %16 = sbr.rel (0) target = $region13
    $region12: #{feed_forward.1} parent=1 // pred_region
      _
    $region13: #{feed_forward.1} parent=1 // pred_fallthru
      _
    // Predicated region
    $region14: #{feed_forward.1} parent=1 // pred_check
      _
    $region15: #{feed_forward.1} parent=1 // pred_check_branch
      %18 = sbr.rel (0) target = $region17
    $region16: #{feed_forward.1} parent=1 // pred_region
      _
    $region17: #{feed_forward.1} parent=1 // pred_fallthru
      _
    // Predicated region
    $region18: #{feed_forward.1} parent=1 // pred_check
      _
    $region19: #{feed_forward.1} parent=1 // pred_check_branch
      %20 = sbr.rel (0) target = $region21
    $region20: #{feed_forward.1} parent=1 // pred_region
      _
    $region21: #{feed_forward.1} parent=1 // pred_fallthru
      _
    %v21 = vld [vmem:[%s0] sm:$0xff]
    %v22 = vld [vmem:[%s0 + $0x8] sm:$0xff]
    %v23 = vld [vmem:[%s1] sm:$0xff]
    %v24 = vld [vmem:[%s1 + $0x8] sm:$0xff]
    %v25 = vld [vmem:[%s1 + $0x10] sm:$0xff]
    %v26 = vld [vmem:[%s1 + $0x18] sm:$0xff]
    %v27 = vld [vmem:[%s2] sm:$0x1]
    %v29 = vlaneseq
    %v30 = vshrl.u32 %v29, 7
    %v31 = vsub.s32 0, %v30
    %v32 = vrot.slane %v27, %v31
    %vm34 = vcmask 261120
    %v36 = vsel %vm34, %v21, 0
    %v39 = vsel %vm34, %v22, 0
    %41 = vmatprep.subr.mxu0 0.0
    %42 = vmatpush1.msra.mxu0 %v23
    %43 = vmatprep.subr.mxu0 0.0
    %44 = vmatpush1.msra.mxu0 %v24
    %45 = vmatprep.subr.mxu0 0.0
    %46 = vmatpush1.msra.mxu0 %v25
    %47 = vmatprep.subr.mxu0 0.0
    %48 = vmatpush1.msra.mxu0 %v26
    %49 = vmatprep.subr.mxu0 0.0
    %50 = vmatpush1.msra.mxu0 0.0
    %51 = vmatprep.subr.mxu0 0.0
    %52 = vmatpush1.msra.mxu0 0.0
    %53 = vmatprep.subr.mxu0 0.0
    %54 = vmatpush1.msra.mxu0 0.0
    %55 = vmatprep.subr.mxu0 0.0
    %56 = vmatpush1.msra.mxu0 0.0
    %57 = vmatprep.subr.mxu0 0.0
    %58 = vmatpush1.msra.mxu0 0.0
    %59 = vmatprep.subr.mxu0 0.0
    %60 = vmatpush1.msra.mxu0 0.0
    %61 = vmatprep.subr.mxu0 0.0
    %62 = vmatpush1.msra.mxu0 0.0
    %63 = vmatprep.subr.mxu0 0.0
    %64 = vmatpush1.msra.mxu0 0.0
    %65 = vmatprep.subr.mxu0 0.0
    %66 = vmatpush1.msra.mxu0 0.0
    %67 = vmatprep.subr.mxu0 0.0
    %68 = vmatpush1.msra.mxu0 0.0
    %69 = vmatprep.subr.mxu0 0.0
    %70 = vmatpush1.msra.mxu0 0.0
    %71 = vmatprep.subr.mxu0 0.0
    %72 = vmatpush1.msra.mxu0 0.0
    %73 = vmatprep.subr.mxu0 0.0
    %74 = vmatpush1.msra.mxu0 0.0
    %75 = vmatprep.subr.mxu0 0.0
    %76 = vmatpush1.msra.mxu0 0.0
    %77 = vmatprep.subr.mxu0 0.0
    %78 = vmatpush1.msra.mxu0 0.0
    %79 = vmatprep.subr.mxu0 0.0
    %80 = vmatpush1.msra.mxu0 0.0
    %81 = vmatprep.subr.mxu0 0.0
    %82 = vmatpush1.msra.mxu0 0.0
    %83 = vmatprep.subr.mxu0 0.0
    %84 = vmatpush1.msra.mxu0 0.0
    %85 = vmatprep.subr.mxu0 0.0
    %86 = vmatpush1.msra.mxu0 0.0
    %87 = vmatprep.subr.mxu0 0.0
    %88 = vmatpush1.msra.mxu0 0.0
    %89 = vmatprep.subr.mxu0 0.0
    %90 = vmatpush1.msra.mxu0 0.0
    %91 = vmatprep.subr.mxu0 0.0
    %92 = vmatpush1.msra.mxu0 0.0
    %93 = vmatprep.subr.mxu0 0.0
    %94 = vmatpush1.msra.mxu0 0.0
    %95 = vmatprep.subr.mxu0 0.0
    %96 = vmatpush1.msra.mxu0 0.0
    %97 = vmatprep.subr.mxu0 0.0
    %98 = vmatpush1.msra.mxu0 0.0
    %99 = vmatprep.subr.mxu0 0.0
    %100 = vmatpush1.msra.mxu0 0.0
    %101 = vmatprep.subr.mxu0 0.0
    %102 = vmatpush1.msra.mxu0 0.0
    %103 = vmatprep.subr.mxu0 0.0
    %104 = vmatpush1.msra.mxu0 0.0
    %105 = vmatprep.mubr.f32.mxu0 0.0
    %106 = vmatmul.mubr.f32.gmra.mrb[0].mxu0 %v36
    %v107 = vpop.f32.mrb[0].mxu0
    %v108 = vadd.f32 %v32, %v107
    %v109 = vpop.f32.mrb[0].mxu0
    %110 = vmatprep.mubr.f32.mxu0 0.0
    %111 = vmatmul.mubr.f32.gmra.mrb[0].mxu0 %v39
    %v112 = vpop.f32.mrb[0].mxu0
    %v113 = vadd.f32 %v32, %v112
    %v114 = vpop.f32.mrb[0].mxu0
    %115 = vdwg.mxu0
    %v116 = vmax.f32 %v108, 0.0
    %v117 = vmax.f32 %v113, 0.0
    %v118 = vld [vmem:[%s3] sm:$0xff]
    %v119 = vld [vmem:[%s3 + $0x8] sm:$0xff]
    %v120 = vld [vmem:[%s3 + $0x10] sm:$0xff]
    %v121 = vld [vmem:[%s3 + $0x18] sm:$0xff]
    %v122 = vld [vmem:[%s3 + $0x20] sm:$0xff]
    %v123 = vld [vmem:[%s3 + $0x28] sm:$0xff]
    %v124 = vld [vmem:[%s3 + $0x30] sm:$0xff]
    %v125 = vld [vmem:[%s3 + $0x38] sm:$0xff]
    %v126 = vld [vmem:[%s3 + $0x40] sm:$0xff]
    %v127 = vld [vmem:[%s3 + $0x48] sm:$0xff]
    %v128 = vld [vmem:[%s3 + $0x50] sm:$0xff]
    %v129 = vld [vmem:[%s3 + $0x58] sm:$0xff]
    %v130 = vld [vmem:[%s3 + $0x60] sm:$0xff]
    %v131 = vld [vmem:[%s3 + $0x68] sm:$0xff]
    %v132 = vld [vmem:[%s3 + $0x70] sm:$0xff]
    %v133 = vld [vmem:[%s3 + $0x78] sm:$0xff]
    %134 = vmatprep.subr.mxu0 0.0
    %135 = vmatpush1.msra.mxu0 %v118
    %136 = vmatprep.subr.mxu0 0.0
    %137 = vmatpush1.msra.mxu0 %v119
    %138 = vmatprep.subr.mxu0 0.0
    %139 = vmatpush1.msra.mxu0 %v120
    %140 = vmatprep.subr.mxu0 0.0
    %141 = vmatpush1.msra.mxu0 %v121
    %142 = vmatprep.subr.mxu0 0.0
    %143 = vmatpush1.msra.mxu0 %v122
    %144 = vmatprep.subr.mxu0 0.0
    %145 = vmatpush1.msra.mxu0 %v123
    %146 = vmatprep.subr.mxu0 0.0
    %147 = vmatpush1.msra.mxu0 %v124
    %148 = vmatprep.subr.mxu0 0.0
    %149 = vmatpush1.msra.mxu0 %v125
    %150 = vmatprep.subr.mxu0 0.0
    %151 = vmatpush1.msra.mxu0 %v126
    %152 = vmatprep.subr.mxu0 0.0
    %153 = vmatpush1.msra.mxu0 %v127
    %154 = vmatprep.subr.mxu0 0.0
    %155 = vmatpush1.msra.mxu0 %v128
    %156 = vmatprep.subr.mxu0 0.0
    %157 = vmatpush1.msra.mxu0 %v129
    %158 = vmatprep.subr.mxu0 0.0
    %159 = vmatpush1.msra.mxu0 %v130
    %160 = vmatprep.subr.mxu0 0.0
    %161 = vmatpush1.msra.mxu0 %v131
    %162 = vmatprep.subr.mxu0 0.0
    %163 = vmatpush1.msra.mxu0 %v132
    %164 = vmatprep.subr.mxu0 0.0
    %165 = vmatpush1.msra.mxu0 %v133
    %166 = vmatprep.subr.mxu0 0.0
    %167 = vmatpush1.msra.mxu0 0.0
    %168 = vmatprep.subr.mxu0 0.0
    %169 = vmatpush1.msra.mxu0 0.0
    %170 = vmatprep.subr.mxu0 0.0
    %171 = vmatpush1.msra.mxu0 0.0
    %172 = vmatprep.subr.mxu0 0.0
    %173 = vmatpush1.msra.mxu0 0.0
    %174 = vmatprep.subr.mxu0 0.0
    %175 = vmatpush1.msra.mxu0 0.0
    %176 = vmatprep.subr.mxu0 0.0
    %177 = vmatpush1.msra.mxu0 0.0
    %178 = vmatprep.subr.mxu0 0.0
    %179 = vmatpush1.msra.mxu0 0.0
    %180 = vmatprep.subr.mxu0 0.0
    %181 = vmatpush1.msra.mxu0 0.0
    %182 = vmatprep.subr.mxu0 0.0
    %183 = vmatpush1.msra.mxu0 0.0
    %184 = vmatprep.subr.mxu0 0.0
    %185 = vmatpush1.msra.mxu0 0.0
    %186 = vmatprep.subr.mxu0 0.0
    %187 = vmatpush1.msra.mxu0 0.0
    %188 = vmatprep.subr.mxu0 0.0
    %189 = vmatpush1.msra.mxu0 0.0
    %190 = vmatprep.subr.mxu0 0.0
    %191 = vmatpush1.msra.mxu0 0.0
    %192 = vmatprep.subr.mxu0 0.0
    %193 = vmatpush1.msra.mxu0 0.0
    %194 = vmatprep.subr.mxu0 0.0
    %195 = vmatpush1.msra.mxu0 0.0
    %196 = vmatprep.subr.mxu0 0.0
    %197 = vmatpush1.msra.mxu0 0.0
    %198 = vmatprep.mubr.f32.mxu0 0.0
    %199 = vmatmul.mubr.f32.gmra.mrb[0].mxu0 %v116
    %v200 = vpop.f32.mrb[0].mxu0
    %v201 = vadd.f32 0.0, %v200
    %v202 = vpop.f32.mrb[0].mxu0
    %203 = vmatprep.mubr.f32.mxu0 0.0
    %204 = vmatmul.mubr.f32.gmra.mrb[0].mxu0 %v117
    %v205 = vpop.f32.mrb[0].mxu0
    %v206 = vadd.f32 0.0, %v205
    %v207 = vpop.f32.mrb[0].mxu0
    %208 = vdwg.mxu0
    %p209 = scmp.eq.s32.totalorder 0, 0
    // Predicated region
    $region22: #{feed_forward.1} parent=1 // pred_check
      %p210 = pneg %p209
    $region23: #{feed_forward.1} parent=1 // pred_check_branch
      %212 = sbr.rel (%p210) target = $region25
    $region24: #{feed_forward.1} parent=1 // pred_region
      %v213 = vld [vmem:[%s4] sm:$0x1]
      %v215 = vlaneseq
      %v216 = vshrl.u32 %v215, 7
      %v217 = vsub.s32 0, %v216
      %v218 = vrot.slane %v213, %v217
      %v220 = vadd.f32 %v201, %v218
      %v221 = vadd.f32 %v206, %v218
      %222 = vst.msk [vmem:[#allocation2] sm:$0xff] %vm34, %v220
      %223 = vst.msk [vmem:[#allocation2 + $0x8] sm:$0xff] %vm34, %v221
    $region25: #{feed_forward.1} parent=1 // pred_fallthru
      _
    %p224 = scmp.ne.s32.totalorder 0, 0
    // Predicated region
    $region26: #{feed_forward.1} parent=1 // pred_check
      %p225 = pneg %p224
    $region27: #{feed_forward.1} parent=1 // pred_check_branch
      %227 = sbr.rel (%p225) target = $region29
    $region28: #{feed_forward.1} parent=1 // pred_region
      %v228 = vld [vmem:[#allocation2] sm:$0xff]
      %v229 = vld [vmem:[#allocation2 + $0x8] sm:$0xff]
      %v230 = vadd.f32 %v228, %v201
      %v231 = vadd.f32 %v229, %v206
      %232 = vst.msk [vmem:[#allocation2] sm:$0xff] %vm34, %v230
      %233 = vst.msk [vmem:[#allocation2 + $0x8] sm:$0xff] %vm34, %v231
    $region29: #{feed_forward.1} parent=1 // pred_fallthru
      _
    // Predicated region
    $region30: #{feed_forward.1} parent=1 // pred_check
      _
    $region31: #{feed_forward.1} parent=1 // pred_check_branch
      %235 = sbr.rel (0) target = $region33
    $region32: #{feed_forward.1} parent=1 // pred_region
      %s237 = ssub.s32 256, 256
      %238 = vsyncadd [#allocation3], %s237
      %s239 = sshll.u32 [#allocation2], 4
      %s240 = int_to_ptr.vmem [resolvable:$true] %s239
      %245 = dma.vmem_to_hbm [thread:$0]  %s240, 256, %s5, [#allocation3], 128, 128, 8
    $region33: #{feed_forward.1} parent=1 // pred_fallthru
      _
    // Predicated region
    $region34: #{feed_forward.1} parent=1 // pred_check
      _
    $region35: #{feed_forward.1} parent=1 // pred_check_branch
      %247 = sbr.rel (0) target = $region37
    $region36: #{feed_forward.1} parent=1 // pred_region
      %248 = dma.done [#allocation3], 256
    $region37: #{feed_forward.1} parent=1 // pred_fallthru
      _
    %249 = vsyncpa [#allocation3], 1

</llo_original>
